<compile_context>
chip_gen: v5e
topology: v5e:2x2
jax: 0.10.0
libtpu: 0.0.40
codegen_flags: <defaults>
</compile_context>

<pallas_src>
import jax
import jax.numpy as jnp
from jax.experimental import pallas as pl
from jax.experimental.pallas import tpu as pltpu

_LANE = 128


def _sublane_tile(dtype) -> int:
    # sublane packing: 8 rows for 4-byte, 16 for 2-byte, 32 for 1-byte dtypes
    return {4: 8, 2: 16, 1: 32}.get(jnp.dtype(dtype).itemsize, 8)


def _make_kernel_2d(split):
    """(N_tile, C*H*W) layout; `split` = C_in*H*W, a multiple of 128."""

    def kernel(x_ref, o_ref):
        # Wide, unmasked, lane-dense store of the data region.
        o_ref[:, :split] = x_ref[...]
        if split < o_ref.shape[1]:
            # Wide, unmasked zero store of the padded channel region.
            o_ref[:, split:] = jnp.zeros(
                (o_ref.shape[0], o_ref.shape[1] - split), dtype=o_ref.dtype
            )

    return kernel


def _make_kernel_3d(in_channels):
    """(N_tile, C, H*W) fallback layout; two stores, no in-register concat."""

    def kernel(x_ref, o_ref):
        o_ref[:, :in_channels, :] = x_ref[...]
        if in_channels < o_ref.shape[1]:
            o_ref[:, in_channels:, :] = jnp.zeros(
                (o_ref.shape[0], o_ref.shape[1] - in_channels, o_ref.shape[2]),
                dtype=o_ref.dtype,
            )

    return kernel


def identity_padding(x, in_channels, out_channels, *, target_block_bytes=8 << 20):
    """Pallas equivalent of IdentityPadding.forward for NCHW input x."""
    assert out_channels >= in_channels
    n, c, h, w = x.shape
    assert c == in_channels
    hw = h * w
    dtype = x.dtype
    itemsize = jnp.dtype(dtype).itemsize
    sublane = _sublane_tile(dtype)

    w_in = in_channels * hw
    w_out = out_channels * hw

    # HBM traffic per batch element (read C_in*HW + write C_out*HW).
    per_batch_bytes = (w_in + w_out) * itemsize

    # --- choose how many batch elements to process per grid step -------------
    # Target ~8 MiB of traffic per step to amortize the ~0.35 us per-step
    # pipeline overhead, but never let one step's blocks exceed ~12 MiB so the
    # double-buffered working set stays well under v7x's scoped VMEM budget.
    budget_tiles = max(1, min(target_block_bytes, 12 << 20) // max(per_batch_bytes, 1))
    if budget_tiles >= n:
        n_tile = n  # one block along batch (full dim)
    elif budget_tiles >= sublane:
        # Multiple of the sublane count keeps vregs fully packed now that
        # batch sits on the sublane axis.
        n_tile = (budget_tiles // sublane) * sublane
    else:
        n_tile = budget_tiles  # per-batch block already large; Mosaic pads sublanes
    grid = (pl.cdiv(n, n_tile),)

    # --- pick layout ----------------------------------------------------------
    use_2d = (w_in % _LANE) == 0
    if use_2d:
        x_op = x.reshape(n, w_in)
        kernel = _make_kernel_2d(w_in)
        in_spec = pl.BlockSpec((n_tile, w_in), lambda i: (i, 0))
        out_spec = pl.BlockSpec((n_tile, w_out), lambda i: (i, 0))
        out_shape = jax.ShapeDtypeStruct((n, w_out), dtype)
    else:
        x_op = x.reshape(n, in_channels, hw)
        kernel = _make_kernel_3d(in_channels)
        in_spec = pl.BlockSpec((n_tile, in_channels, hw), lambda i: (i, 0, 0))
        out_spec = pl.BlockSpec((n_tile, out_channels, hw), lambda i: (i, 0, 0))
        out_shape = jax.ShapeDtypeStruct((n, out_channels, hw), dtype)

    # --- VMEM budget + cost hint ---------------------------------------------
    block_bytes = n_tile * per_batch_bytes
    vmem_limit = int(min(64 << 20, max(2 * block_bytes + (2 << 20), 8 << 20)))
    cost = pl.CostEstimate(
        flops=0,
        transcendentals=0,
        bytes_accessed=n * per_batch_bytes,
    )

    out_flat = pl.pallas_call(
        kernel,
        out_shape=out_shape,
        grid_spec=pltpu.PrefetchScalarGridSpec(
            num_scalar_prefetch=0,
            grid=grid,
            in_specs=[in_spec],
            out_specs=out_spec,
        ),
        compiler_params=pltpu.CompilerParams(
            dimension_semantics=("parallel",),
            vmem_limit_bytes=vmem_limit,
        ),
        cost_estimate=cost,
    )(x_op)

    return out_flat.reshape(n, out_channels, h, w)


if __name__ == "__main__":
    key = jax.random.PRNGKey(0)
    N, C_IN, C_OUT, H, W = 2, 4, 8, 16, 16  # add_channels = 4
    x = jax.random.normal(key, (N, C_IN, H, W), dtype=jnp.float32)

    out = identity_padding(x, C_IN, C_OUT)
    out = jax.block_until_ready(out)

    # Reference (plain JAX): zero-pad the end of the channel axis, matching
    # F.pad(x, (0, 0, 0, 0, 0, add_channels)).
    ref = jnp.pad(x, ((0, 0), (0, C_OUT - C_IN), (0, 0), (0, 0)))
    assert out.shape == (N, C_OUT, H, W)
    assert out.dtype == x.dtype
    assert jnp.allclose(out, ref)

    print("KERNEL_OK")
</pallas_src>

<mosaic_0001>
module attributes {stable_mosaic.version = 11 : i64} {
  func.func @kernel(%arg0: i32, %arg1: memref<2x1024xf32, #tpu.memory_space<vmem>>, %arg2: memref<2x2048xf32, #tpu.memory_space<vmem>>) attributes {dimension_semantics = [#tpu.dimension_semantics<parallel>], iteration_bounds = array<i64: 1>, scalar_prefetch = 0 : i64, scratch_operands = 0 : i64, tpu.core_type = #tpu.core_type<tc>, window_params = [{transform_indices = @transform_0, window_bounds = array<i64: 2, 1024>}, {transform_indices = @transform_1, window_bounds = array<i64: 2, 2048>}]} {
    %c0 = arith.constant 0 : index
    %c0_0 = arith.constant 0 : index
    %0 = vector.load %arg1[%c0, %c0_0] : memref<2x1024xf32, #tpu.memory_space<vmem>>, vector<2x1024xf32>
    %c0_1 = arith.constant 0 : index
    %c0_2 = arith.constant 0 : index
    %1 = vector.load %arg2[%c0_1, %c0_2] : memref<2x2048xf32, #tpu.memory_space<vmem>>, vector<2x1024xf32>
    tpu.vector_store %arg2[%c0_1, %c0_2], %0 {strides = array<i32>} : memref<2x2048xf32, #tpu.memory_space<vmem>>, vector<2x1024xf32>,
    %cst = arith.constant 0.000000e+00 : f32
    %2 = vector.broadcast %cst : f32 to vector<2x1024xf32>
    %c0_3 = arith.constant 0 : index
    %c1024 = arith.constant 1024 : index
    %3 = vector.load %arg2[%c0_3, %c1024] : memref<2x2048xf32, #tpu.memory_space<vmem>>, vector<2x1024xf32>
    tpu.vector_store %arg2[%c0_3, %c1024], %2 {strides = array<i32>} : memref<2x2048xf32, #tpu.memory_space<vmem>>, vector<2x1024xf32>,
    return
  }
  func.func @transform_0(%arg0: i32) -> (i32, i32) {
    %c0_i32 = arith.constant 0 : i32
    %c0_i32_0 = arith.constant 0 : i32
    return %arg0, %c0_i32 : i32, i32
  }
  func.func @transform_1(%arg0: i32) -> (i32, i32) {
    %c0_i32 = arith.constant 0 : i32
    %c0_i32_0 = arith.constant 0 : i32
    return %arg0, %c0_i32 : i32, i32
  }
}

</mosaic_0001>

<llo_original>
// kernel: tpu_custom_call.1
$region0: #{tpu_custom_call.1}
  #allocation0 [shape = 'u32[]', space=smem, size = 0x4, offset = 0x4, fixed_abs, tag = 'smem constant byte address 0x4 - core index']
  #allocation1 [shape = 'u32[72,128]{1,0:T(1,128)}', space=vmem, size = 0x9000, scoped, tag = 'internal scratch']
  %s0 = inlined_call_operand.hbm [shape: f32[2,1024], index: 0, kind: input, shape index: {}]
  %s1 = inlined_call_operand.hbm [shape: f32[2,2048], index: 1, kind: output, shape index: {}]
  %s2 = sld [smem:[#allocation0]]
  $region18: #{tpu_custom_call.1} parent=0
    _
  %s4 = ssub.s32 1, %s2
  %s5 = scalar_select 0, %s4, %s2
  $region1: #{tpu_custom_call.1} parent=0
    #allocation2 [shape = 'u8[8192]{0}', space=vmem, size = 0x2000, scoped, tag = 'input window, operand 0, single buffered']
    #allocation3 [shape = 's32[1]{0}', space=sflag, size = 0x4, scoped, tag = 'scoped memory for tpu_custom_call.1']
    #allocation4 [shape = 's32[1]{0}', space=sflag, size = 0x4, scoped, tag = 'scoped memory for tpu_custom_call.1']
    #allocation5 [shape = 'u8[16384]{0}', space=vmem, size = 0x4000, scoped, tag = 'output window, operand 0, single buffered']
    %6 = vsyncpa [#allocation3], 0
    %7 = vsyncpa [#allocation4], 0
    // Predicated region
    $region2: #{tpu_custom_call.1} parent=1 // pred_check
      _
    $region3: #{tpu_custom_call.1} parent=1 // pred_check_branch
      %9 = sbr.rel (0) target = $region5
    $region4: #{tpu_custom_call.1} parent=1 // pred_region
      %11 = vsyncadd [#allocation3], 0
      %s13 = sshll.u32 %s0, 4
      %s14 = int_to_ptr.hbm [resolvable:$true] %s13
      %s15 = sshll.u32 [#allocation2], 4
      %s16 = int_to_ptr.vmem [resolvable:$true] %s15
      %18 = dma.hbm_to_vmem [thread:$0]  %s14, 256, %s16, [#allocation3]
    $region5: #{tpu_custom_call.1} parent=1 // pred_fallthru
      _
    // Predicated region
    $region6: #{tpu_custom_call.1} parent=1 // pred_check
      _
    $region7: #{tpu_custom_call.1} parent=1 // pred_check_branch
      %20 = sbr.rel (0) target = $region9
    $region8: #{tpu_custom_call.1} parent=1 // pred_region
      %22 = dma.done [#allocation3], 256
    $region9: #{tpu_custom_call.1} parent=1 // pred_fallthru
      _
    %v23 = vld [vmem:[#allocation2] sm:$0xff]
    %v24 = vld [vmem:[#allocation2 + $0x8] sm:$0xff]
    %25 = vst [vmem:[#allocation5] sm:$0xff] %v23
    %26 = vst [vmem:[#allocation5 + $0x8] sm:$0xff] %v24
    %27 = vst [vmem:[#allocation5 + $0x10] sm:$0xff] 0.0
    %28 = vst [vmem:[#allocation5 + $0x18] sm:$0xff] 0.0
    // Predicated region
    $region10: #{tpu_custom_call.1} parent=1 // pred_check
      _
    $region11: #{tpu_custom_call.1} parent=1 // pred_check_branch
      %30 = sbr.rel (0) target = $region13
    $region12: #{tpu_custom_call.1} parent=1 // pred_region
      %32 = vsyncadd [#allocation4], 0
      %s34 = sshll.u32 [#allocation5], 4
      %s35 = int_to_ptr.vmem [resolvable:$true] %s34
      %s36 = sshll.u32 %s1, 4
      %s37 = int_to_ptr.hbm [resolvable:$true] %s36
      %39 = dma.vmem_to_hbm [thread:$0]  %s35, 512, %s37, [#allocation4]
    $region13: #{tpu_custom_call.1} parent=1 // pred_fallthru
      _
    // Predicated region
    $region14: #{tpu_custom_call.1} parent=1 // pred_check
      _
    $region15: #{tpu_custom_call.1} parent=1 // pred_check_branch
      %41 = sbr.rel (0) target = $region17
    $region16: #{tpu_custom_call.1} parent=1 // pred_region
      %43 = dma.done [#allocation4], 512
    $region17: #{tpu_custom_call.1} parent=1 // pred_fallthru
      _
    %44 = vsyncpa [#allocation3], 1
    %45 = vsyncpa [#allocation4], 1

</llo_original>
